<compile_context>
chip_gen: v6e
topology: v6e:2x2x1
jax: 0.10.0
libtpu: 0.0.40
codegen_flags: <defaults>
</compile_context>

<pallas_src>
import math
import functools
import numpy as np
import jax
import jax.numpy as jnp
from jax.experimental import pallas as pl
from jax.experimental.pallas import tpu as pltpu


# ---------------------------------------------------------------- kernels ---

def _seg_kernel(x_ref, w_ref, b_ref, o_ref, *, compute_dtype):
    # x: (1, Cin, tHW)   w: (Cout, Cin)   b: (Cout, 1)   o: (1, Cout, tHW)
    x = x_ref[0].astype(compute_dtype)                       # bf16 -> native MXU
    acc = jnp.dot(w_ref[...], x,
                  preferred_element_type=jnp.float32)        # (Cout, tHW) f32
    o_ref[0] = (acc + b_ref[...]).astype(o_ref.dtype)


def _up_logsoftmax_kernel(s_ref, a_ref, bt_ref, o_ref, y_sc, *, classes, cout):
    # s: (1, Cout, H, W)   a: (tHo, H)   bt: (W, Wo)   o: (1, Cout, tHo, Wo)
    # y_sc: (Cout, tHo, Wo) f32 scratch holding the upsampled strip.
    A = a_ref[...]                                           # (tHo, H)
    Bt = bt_ref[...]                                         # (W, Wo)

    # Separable upsample, H-side first so every op only touches this strip
    # (no cross-strip redundancy).  The (tHo, W) intermediate stays in vregs;
    # the second matmul is lane-dense (N = Wo, multiple of 128).
    for c in range(cout):
        t = jnp.dot(A, s_ref[0, c],
                    preferred_element_type=jnp.float32)      # (tHo, W) f32
        y_sc[c] = jnp.dot(t.astype(Bt.dtype), Bt,
                          preferred_element_type=jnp.float32)  # (tHo, Wo) f32

    # Streaming log-softmax across the first `classes` channels (torch dim=1),
    # all math in f32; only the final store is cast to the output dtype.
    m = y_sc[0]
    for c in range(1, classes):
        m = jnp.maximum(m, y_sc[c])
    se = jnp.exp(y_sc[0] - m)
    for c in range(1, classes):
        se = se + jnp.exp(y_sc[c] - m)
    lse = m + jnp.log(se)
    for c in range(classes):
        o_ref[0, c] = (y_sc[c] - lse).astype(o_ref.dtype)
    for c in range(classes, cout):              # last 2 channels pass through
        o_ref[0, c] = y_sc[c].astype(o_ref.dtype)


# ------------------------------------------------------------------- glue ---

def make_bilinear_up_matrix(size, kernel=16, stride=8, padding=4):
    """1-D conv-transpose matrix with fill_up_weights (bilinear) weights."""
    f = math.ceil(kernel / 2)
    c = (2 * f - 1 - f % 2) / (2.0 * f)
    w1d = np.array([1.0 - abs(i / f - c) for i in range(kernel)], dtype=np.float32)
    out_size = (size - 1) * stride - 2 * padding + kernel
    A = np.zeros((out_size, size), dtype=np.float32)
    for o in range(out_size):
        for i in range(size):
            k = o + padding - stride * i
            if 0 <= k < kernel:
                A[o, i] = w1d[k]
    return jnp.asarray(A)


def _pick_tile(dim, candidates):
    """Largest candidate that strictly subdivides `dim`; else the full dim."""
    for t in candidates:
        if dim > t and dim % t == 0:
            return t
    return dim


def _vmem_limit_bytes():
    # Per-generation scoped-VMEM limit (v7x: 64 MiB physical, v5e/v6e: 128 MiB)
    # with ~25% headroom.  Falls back to a safe constant if the query fails.
    try:
        phys = pltpu.get_tpu_info().vmem_capacity_bytes
        return int(max(32 << 20, min(100 << 20, 0.75 * phys)))
    except Exception:
        return 64 << 20


def drn_double_seg_forward(x, seg_w, seg_b, classes, *,
                           compute_dtype=jnp.bfloat16,
                           out_dtype=jnp.bfloat16):
    """x: (N, Cin, H, W) base feature map; seg_w: (Cout, Cin, 1, 1); seg_b: (Cout,).

    compute_dtype: MXU operand dtype (bf16 default; f32 for bit-accurate math).
    out_dtype: final output dtype (bf16 default halves HBM writeback)."""
    N, Cin, H, W = x.shape
    Cout = classes + 2
    assert seg_w.shape == (Cout, Cin, 1, 1) and seg_b.shape == (Cout,)
    HW = H * W

    # ----- seg: 1x1 conv + bias, NCHW-native (Cout,Cin)@(Cin,tHW) matmul -----
    thw = _pick_tile(HW, (2048, 1024, 512, 256, 128))   # lane-dense pixel tiles
    x3 = x.reshape(N, Cin, HW)                          # metadata-only reshape
    w2 = seg_w.reshape(Cout, Cin).astype(compute_dtype)
    b2 = seg_b.reshape(Cout, 1).astype(jnp.float32)
    seg_cost = pl.CostEstimate(
        flops=2 * N * HW * Cin * Cout,
        transcendentals=0,
        bytes_accessed=4 * N * Cin * HW + 2 * N * Cout * HW + 2 * Cout * Cin + 4 * Cout)
    seg_kern = functools.partial(_seg_kernel, compute_dtype=compute_dtype)
    s3 = pl.pallas_call(
        seg_kern,
        out_shape=jax.ShapeDtypeStruct((N, Cout, HW), compute_dtype),
        grid=(N, HW // thw),
        in_specs=[pl.BlockSpec((1, Cin, thw), lambda n, p: (n, 0, p)),
                  pl.BlockSpec((Cout, Cin), lambda n, p: (0, 0)),
                  pl.BlockSpec((Cout, 1), lambda n, p: (0, 0))],
        out_specs=pl.BlockSpec((1, Cout, thw), lambda n, p: (n, 0, p)),
        compiler_params=pltpu.CompilerParams(
            dimension_semantics=("parallel", "parallel")),
        cost_estimate=seg_cost,
    )(x3, w2, b2)
    s = s3.reshape(N, Cout, H, W)                       # metadata-only reshape

    # ----- up (depthwise bilinear conv-transpose) + log_softmax/cat, fused ---
    A = make_bilinear_up_matrix(H).astype(compute_dtype)    # (Ho, H), exact in bf16
    B = make_bilinear_up_matrix(W).astype(compute_dtype)    # (Wo, W), exact in bf16
    Ho, Wo = A.shape[0], B.shape[0]
    # tHo capped at 128: per-step working set (out dbl-buffer + y_sc) stays
    # ~11 MB at production Cout=21/Wo=512, safe within v7x's 64 MiB VMEM.
    tHo = _pick_tile(Ho, (128, 64, 32, 16, 8))
    n_strips = Ho // tHo
    up_cost = pl.CostEstimate(
        flops=2 * N * Cout * (Ho * H * W + Ho * W * Wo),
        transcendentals=(classes + 1) * N * Ho * Wo,
        bytes_accessed=(2 * N * n_strips * Cout * H * W
                        + jnp.dtype(out_dtype).itemsize * N * Cout * Ho * Wo))
    up_kern = functools.partial(_up_logsoftmax_kernel, classes=classes, cout=Cout)
    y = pl.pallas_call(
        up_kern,
        out_shape=jax.ShapeDtypeStruct((N, Cout, Ho, Wo), out_dtype),
        grid=(N, n_strips),
        in_specs=[pl.BlockSpec((1, Cout, H, W), lambda n, i: (n, 0, 0, 0)),
                  pl.BlockSpec((tHo, H), lambda n, i: (i, 0)),
                  pl.BlockSpec((W, Wo), lambda n, i: (0, 0))],
        out_specs=pl.BlockSpec((1, Cout, tHo, Wo), lambda n, i: (n, 0, i, 0)),
        scratch_shapes=[pltpu.VMEM((Cout, tHo, Wo), jnp.float32)],
        compiler_params=pltpu.CompilerParams(
            dimension_semantics=("parallel", "parallel"),
            vmem_limit_bytes=_vmem_limit_bytes()),
        cost_estimate=up_cost,
    )(s, A, B.T)
    return y


# -------------------------------------------------------------- reference ---

def reference(x, seg_w, seg_b, classes):
    Cout = classes + 2
    s = jnp.einsum('nchw,oc->nohw', x, seg_w.reshape(Cout, -1)) \
        + seg_b[None, :, None, None]
    A = make_bilinear_up_matrix(x.shape[2])
    B = make_bilinear_up_matrix(x.shape[3])
    y = jnp.einsum('oh,nchw,pw->ncop', A, s, B)
    ls = jax.nn.log_softmax(y[:, :classes], axis=1)
    return jnp.concatenate([ls, y[:, classes:]], axis=1)


# ------------------------------------------------------------------- main ---

if __name__ == "__main__":
    key = jax.random.PRNGKey(0)
    N, Cin, H, W = 2, 16, 16, 16   # Cin = stand-in for DRN `out_dim`
    classes = 4
    Cout = classes + 2

    kx, kw, kb = jax.random.split(key, 3)
    x = jax.random.normal(kx, (N, Cin, H, W), dtype=jnp.float32)
    # seg init: normal(0, sqrt(2/n)) with n = kh*kw*out_channels
    n_fan = 1 * 1 * Cout
    seg_w = jax.random.normal(kw, (Cout, Cin, 1, 1), dtype=jnp.float32) \
        * math.sqrt(2.0 / n_fan)
    seg_b = 0.1 * jax.random.normal(kb, (Cout,), dtype=jnp.float32)

    y_ref = reference(x, seg_w, seg_b, classes)

    # Fast path: bf16 MXU operands + bf16 output (default) — loose tolerance.
    y_fast = drn_double_seg_forward(x, seg_w, seg_b, classes)
    y_fast = jax.block_until_ready(y_fast)
    assert y_fast.shape == (N, Cout, 8 * H, 8 * W), y_fast.shape
    np.testing.assert_allclose(np.asarray(y_fast.astype(jnp.float32)),
                               np.asarray(y_ref), rtol=5e-2, atol=1e-1)

    # Strict path: f32 everywhere — tight tolerance against the reference.
    y32 = drn_double_seg_forward(x, seg_w, seg_b, classes,
                                 compute_dtype=jnp.float32,
                                 out_dtype=jnp.float32)
    y32 = jax.block_until_ready(y32)
    np.testing.assert_allclose(np.asarray(y32), np.asarray(y_ref),
                               rtol=2e-2, atol=2e-3)

    print("KERNEL_OK")
</pallas_src>

<mosaic_0001>
module attributes {stable_mosaic.version = 11 : i64} {
  func.func @_seg_kernel(%arg0: i32, %arg1: i32, %arg2: memref<1x16x128xf32, #tpu.memory_space<vmem>>, %arg3: memref<6x16xbf16, #tpu.memory_space<vmem>>, %arg4: memref<6x1xf32, #tpu.memory_space<vmem>>, %arg5: memref<1x6x128xbf16, #tpu.memory_space<vmem>>) attributes {dimension_semantics = [#tpu.dimension_semantics<parallel>, #tpu.dimension_semantics<parallel>], iteration_bounds = array<i64: 2, 2>, scalar_prefetch = 0 : i64, scratch_operands = 0 : i64, tpu.core_type = #tpu.core_type<tc>, window_params = [{transform_indices = @transform_0, window_bounds = array<i64: 1, 16, 128>}, {pipeline_mode = #tpu.pipeline_mode<synchronous>, transform_indices = @transform_1, window_bounds = array<i64: 6, 16>}, {pipeline_mode = #tpu.pipeline_mode<synchronous>, transform_indices = @transform_2, window_bounds = array<i64: 6, 1>}, {transform_indices = @transform_3, window_bounds = array<i64: 1, 6, 128>}]} {
    %c0 = arith.constant 0 : index
    %c0_0 = arith.constant 0 : index
    %c0_1 = arith.constant 0 : index
    %0 = vector.load %arg2[%c0, %c0_0, %c0_1] : memref<1x16x128xf32, #tpu.memory_space<vmem>>, vector<1x16x128xf32>
    %1 = vector.shape_cast %0 : vector<1x16x128xf32> to vector<16x128xf32>
    %2 = arith.truncf %1 : vector<16x128xf32> to vector<16x128xbf16>
    %c0_2 = arith.constant 0 : index
    %c0_3 = arith.constant 0 : index
    %3 = vector.load %arg3[%c0_2, %c0_3] : memref<6x16xbf16, #tpu.memory_space<vmem>>, vector<6x16xbf16>
    %cst = arith.constant dense<0.000000e+00> : vector<6x128xf32>
    %4 = tpu.matmul %3, %2, %cst {dimension_numbers = #tpu.dot_dimension_numbers<[1], [0], [0], [1], [0, 0, 1, 1], [], []>} : vector<6x16xbf16>, vector<16x128xbf16>, vector<6x128xf32> -> vector<6x128xf32>
    %c0_4 = arith.constant 0 : index
    %c0_5 = arith.constant 0 : index
    %5 = vector.load %arg4[%c0_4, %c0_5] : memref<6x1xf32, #tpu.memory_space<vmem>>, vector<6x1xf32>
    %6 = vector.broadcast %5 : vector<6x1xf32> to vector<6x128xf32>
    %7 = arith.addf %4, %6 : vector<6x128xf32>
    %8 = arith.truncf %7 : vector<6x128xf32> to vector<6x128xbf16>
    %c0_6 = arith.constant 0 : index
    %c0_7 = arith.constant 0 : index
    %c0_8 = arith.constant 0 : index
    %9 = vector.load %arg5[%c0_6, %c0_7, %c0_8] : memref<1x6x128xbf16, #tpu.memory_space<vmem>>, vector<1x6x128xbf16>
    %10 = vector.shape_cast %9 : vector<1x6x128xbf16> to vector<6x128xbf16>
    %11 = vector.shape_cast %8 : vector<6x128xbf16> to vector<1x6x128xbf16>
    tpu.vector_store %arg5[%c0_6, %c0_7, %c0_8], %11 {strides = array<i32>} : memref<1x6x128xbf16, #tpu.memory_space<vmem>>, vector<1x6x128xbf16>,
    return
  }
  func.func @transform_0(%arg0: i32, %arg1: i32) -> (i32, i32, i32) {
    %c0_i32 = arith.constant 0 : i32
    %c0_i32_0 = arith.constant 0 : i32
    return %arg0, %c0_i32, %arg1 : i32, i32, i32
  }
  func.func @transform_1(%arg0: i32, %arg1: i32) -> (i32, i32) {
    %c0_i32 = arith.constant 0 : i32
    %c0_i32_0 = arith.constant 0 : i32
    %c0_i32_1 = arith.constant 0 : i32
    return %c0_i32, %c0_i32_0 : i32, i32
  }
  func.func @transform_2(%arg0: i32, %arg1: i32) -> (i32, i32) {
    %c0_i32 = arith.constant 0 : i32
    %c0_i32_0 = arith.constant 0 : i32
    %c0_i32_1 = arith.constant 0 : i32
    return %c0_i32, %c0_i32_0 : i32, i32
  }
  func.func @transform_3(%arg0: i32, %arg1: i32) -> (i32, i32, i32) {
    %c0_i32 = arith.constant 0 : i32
    %c0_i32_0 = arith.constant 0 : i32
    return %arg0, %c0_i32, %arg1 : i32, i32, i32
  }
}

</mosaic_0001>

<llo_original>
// kernel: tpu_custom_call.1
$region0: #{tpu_custom_call.1}
  #allocation0 [shape = 'u32[]', space=smem, size = 0x4, offset = 0x4, fixed_abs, tag = 'smem constant byte address 0x4 - core index']
  #allocation1 [shape = 'u32[144,128]{1,0:T(1,128)}', space=vmem, size = 0x12000, scoped, tag = 'internal scratch']
  %s0 = inlined_call_operand.hbm [shape: f32[2,16,256], index: 0, kind: input, shape index: {}]
  %s1 = inlined_call_operand.vmem [shape: bf16[6,16], index: 1, kind: input, shape index: {}]
  %s2 = inlined_call_operand.vmem [shape: f32[6,1], index: 2, kind: input, shape index: {}]
  %s3 = inlined_call_operand.vmem [shape: bf16[2,6,256], index: 3, kind: output, shape index: {}]
  %s4 = sld [smem:[#allocation0]]
  $region49: #{tpu_custom_call.1} parent=0
    _
  %s6 = ssub.s32 1, %s4
  %s7 = scalar_select 0, %s6, %s4
  $region1: #{tpu_custom_call.1} parent=0
    #allocation2 [shape = 'u8[16384]{0}', space=vmem, size = 0x4000, scoped, tag = 'input window, operand 0']
    #allocation3 [shape = 's32[2]{0}', space=sflag, size = 0x8, scoped, tag = 'scoped memory for tpu_custom_call.1']
    %8 = vsyncpa [#allocation3], 0
    %s9 = scalar_lea.sflag [#allocation3], 1
    %10 = vsyncpa %s9, 0
    loop: start=0, step=1, limit=6
    $region2: #{tpu_custom_call.1} parent=1 // loop_pre_header
      _
    $region3: #{tpu_custom_call.1} parent=1 // loop_header
      %s12 = sphi 0, %s16
      %p13 = scmp.ge.s32.totalorder %s12, 6
      %s19 = sphi 0, %s31
      %s20 = sphi 0, %s27
      %s21 = sphi 0, %s19
      %s22 = sphi 0, %s20
      %s23 = sphi 0, %s21
      %s24 = sphi 0, %s22
      %s36 = sphi 0, %s38
      %s39 = sphi 0, %s36
      %s40 = sphi 0, %s39
      %s56 = sphi 0, %s40
      %s60 = sphi 0, %s60
      %s62 = sphi 0, %s60
      %s63 = sphi 0, %s62
      %s77 = sphi 0, %s63
      %s81 = sphi 0, %s81
      %s83 = sphi 0, %s81
      %s84 = sphi 0, %s83
      %s98 = sphi 0, %s84
      %s106 = sphi 0, %s108
      %s109 = sphi 0, %s106
      %s110 = sphi 0, %s109
      %s126 = sphi 0, %s110
    $region4: #{tpu_custom_call.1} parent=1 // loop_header_branch
      %15 = sbr.rel (%p13) target = $region8
    $region5: #{tpu_custom_call.1} parent=1 // loop_body
      %s17 = ssub.s32 %s12, 1
      %s18 = ssub.s32 %s12, 2
      %s25 = sadd.s32 1, %s20
      %p26 = scmp.ge.s32.totalorder %s25, 2
      %s27 = scalar_select %p26, 0, %s25
      %s28 = sadd.s32 1, %s19
      %s29 = scalar_select %p26, %s28, %s19
      %p30 = scmp.ge.s32.totalorder %s29, 2
      %s31 = scalar_select %p30, 0, %s29
      %s32 = ssub.s32 %s19, %s31
      %s33 = ssub.s32 %s20, %s27
      %s34 = sor.u32 %s32, %s33
      %p35 = scmp.eq.s32.totalorder %s34, 0
      %s37 = sadd.s32 %s36, 1
      %s38 = scalar_select %p35, %s36, %s37
      %p41 = pneg %p35
      %p42 = scmp.eq.s32.totalorder %s12, 3
      %p43 = por %p41, %p42
      %p44 = scmp.ne.s32.totalorder %s36, %s39
      %p45 = scmp.eq.s32.totalorder %s12, 0
      %p46 = por %p44, %p45
      %p47 = scmp.ne.s32.totalorder %s36, %s39
      %p48 = scmp.eq.s32.totalorder %s17, 3
      %p49 = por %p47, %p48
      %p50 = scmp.ne.s32.totalorder %s39, %s40
      %p51 = scmp.eq.s32.totalorder %s17, 0
      %p52 = por %p50, %p51
      %p53 = scmp.ne.s32.totalorder %s39, %s40
      %p54 = scmp.eq.s32.totalorder %s18, 3
      %p55 = por %p53, %p54
      %p57 = scmp.ne.s32.totalorder %s40, %s56
      %p58 = scmp.eq.s32.totalorder %s18, 0
      %p59 = por %p57, %p58
      %s61 = sadd.s32 %s60, 1
      %p64 = scmp.eq.s32.totalorder %s12, 3
      %p65 = scmp.ne.s32.totalorder %s60, %s62
      %p66 = scmp.eq.s32.totalorder %s12, 0
      %p67 = por %p65, %p66
      %p68 = scmp.ne.s32.totalorder %s60, %s62
      %p69 = scmp.eq.s32.totalorder %s17, 3
      %p70 = por %p68, %p69
      %p71 = scmp.ne.s32.totalorder %s62, %s63
      %p72 = scmp.eq.s32.totalorder %s17, 0
      %p73 = por %p71, %p72
      %p74 = scmp.ne.s32.totalorder %s62, %s63
      %p75 = scmp.eq.s32.totalorder %s18, 3
      %p76 = por %p74, %p75
      %p78 = scmp.ne.s32.totalorder %s63, %s77
      %p79 = scmp.eq.s32.totalorder %s18, 0
      %p80 = por %p78, %p79
      %s82 = sadd.s32 %s81, 1
      %p85 = scmp.eq.s32.totalorder %s12, 3
      %p86 = scmp.ne.s32.totalorder %s81, %s83
      %p87 = scmp.eq.s32.totalorder %s12, 0
      %p88 = por %p86, %p87
      %p89 = scmp.ne.s32.totalorder %s81, %s83
      %p90 = scmp.eq.s32.totalorder %s17, 3
      %p91 = por %p89, %p90
      %p92 = scmp.ne.s32.totalorder %s83, %s84
      %p93 = scmp.eq.s32.totalorder %s17, 0
      %p94 = por %p92, %p93
      %p95 = scmp.ne.s32.totalorder %s83, %s84
      %p96 = scmp.eq.s32.totalorder %s18, 3
      %p97 = por %p95, %p96
      %p99 = scmp.ne.s32.totalorder %s84, %s98
      %p100 = scmp.eq.s32.totalorder %s18, 0
      %p101 = por %p99, %p100
      %s102 = ssub.s32 %s19, %s31
      %s103 = ssub.s32 %s20, %s27
      %s104 = sor.u32 %s102, %s103
      %p105 = scmp.eq.s32.totalorder %s104, 0
      %s107 = sadd.s32 %s106, 1
      %s108 = scalar_select %p105, %s106, %s107
      %p111 = pneg %p105
      %p112 = scmp.eq.s32.totalorder %s12, 3
      %p113 = por %p111, %p112
      %p114 = scmp.ne.s32.totalorder %s106, %s109
      %p115 = scmp.eq.s32.totalorder %s12, 0
      %p116 = por %p114, %p115
      %p117 = scmp.ne.s32.totalorder %s106, %s109
      %p118 = scmp.eq.s32.totalorder %s17, 3
      %p119 = por %p117, %p118
      %p120 = scmp.ne.s32.totalorder %s109, %s110
      %p121 = scmp.eq.s32.totalorder %s17, 0
      %p122 = por %p120, %p121
      %p123 = scmp.ne.s32.totalorder %s109, %s110
      %p124 = scmp.eq.s32.totalorder %s18, 3
      %p125 = por %p123, %p124
      %p127 = scmp.ne.s32.totalorder %s110, %s126
      %p128 = scmp.eq.s32.totalorder %s18, 0
      %p129 = por %p127, %p128
      %p130 = scmp.le.s32.totalorder 1, %s12
      %p131 = scmp.lt.s32.totalorder %s12, 5
      %p132 = pnand %p130, %p131
      %p133 = pneg %p132
      // Predicated region
      $region9: #{tpu_custom_call.1} parent=5 // pred_check
        _
      $region10: #{tpu_custom_call.1} parent=5 // pred_check_branch
        %135 = sbr.rel (%p132) target = $region12
      $region11: #{tpu_custom_call.1} parent=5 // pred_region
        %s136 = ssub.s32 %s12, 1
        // Predicated region
        $region13: #{tpu_custom_call.1} parent=11 // pred_check
          %p137 = pneg %p73
        $region14: #{tpu_custom_call.1} parent=11 // pred_check_branch
          %139 = sbr.rel (%p137) target = $region16
        $region15: #{tpu_custom_call.1} parent=11 // pred_region
          _
        $region16: #{tpu_custom_call.1} parent=11 // pred_fallthru
          _
        // Predicated region
        $region17: #{tpu_custom_call.1} parent=11 // pred_check
          %p140 = pneg %p94
        $region18: #{tpu_custom_call.1} parent=11 // pred_check_branch
          %142 = sbr.rel (%p140) target = $region20
        $region19: #{tpu_custom_call.1} parent=11 // pred_region
          _
        $region20: #{tpu_custom_call.1} parent=11 // pred_fallthru
          _
      $region12: #{tpu_custom_call.1} parent=5 // pred_fallthru
        _
      %p143 = scmp.lt.s32.totalorder %s12, 4
      // Predicated region
      $region21: #{tpu_custom_call.1} parent=5 // pred_check
        %p144 = pneg %p143
      $region22: #{tpu_custom_call.1} parent=5 // pred_check_branch
        %146 = sbr.rel (%p144) target = $region24
      $region23: #{tpu_custom_call.1} parent=5 // pred_region
        // Predicated region
        $region25: #{tpu_custom_call.1} parent=23 // pred_check
          %p147 = pneg %p46
        $region26: #{tpu_custom_call.1} parent=23 // pred_check_branch
          %149 = sbr.rel (%p147) target = $region28
        $region27: #{tpu_custom_call.1} parent=23 // pred_region
          %s150 = sand.u32 %s36, 1
          %s151 = scalar_lea.sflag [#allocation3], %s150
          %s152 = sand.u32 %s36, 1
          %s153 = smul.addr %s152, 16
          %s154 = scalar_lea.vmem [#allocation2], %s153
          %s156 = ssub.s32 256, 256
          %157 = vsyncadd %s151, %s156
          %s158 = smul.addr %s19, 4
          %s159 = sadd.s32 %s20, %s158
          %s160 = smul.addr %s159, 128
          %s161 = scalar_lea.hbm %s0, %s160
          %s162 = sshll.u32 %s154, 4
          %s163 = int_to_ptr.vmem [resolvable:$true] %s162
          %168 = dma.hbm_to_vmem [thread:$0]  %s161, 256, %s163, %s151, 256, 128, 8
        $region28: #{tpu_custom_call.1} parent=23 // pred_fallthru
          _
      $region24: #{tpu_custom_call.1} parent=5 // pred_fallthru
        _
      %p169 = scmp.le.s32.totalorder 1, %s12
      %p170 = scmp.lt.s32.totalorder %s12, 5
      %p171 = pnand %p169, %p170
      %p172 = pneg %p171
      // Predicated region
      $region29: #{tpu_custom_call.1} parent=5 // pred_check
        _
      $region30: #{tpu_custom_call.1} parent=5 // pred_check_branch
        %174 = sbr.rel (%p171) target = $region32
      $region31: #{tpu_custom_call.1} parent=5 // pred_region
        %s175 = ssub.s32 %s12, 1
        %s176 = sand.u32 %s39, 1
        %s177 = scalar_lea.sflag [#allocation3], %s176
        %s178 = sand.u32 %s39, 1
        %s179 = smul.addr %s178, 16
        %s180 = scalar_lea.vmem [#allocation2], %s179
        // Predicated region
        $region33: #{tpu_custom_call.1} parent=31 // pred_check
          %p181 = pneg %p52
        $region34: #{tpu_custom_call.1} parent=31 // pred_check_branch
          %183 = sbr.rel (%p181) target = $region36
        $region35: #{tpu_custom_call.1} parent=31 // pred_region
          %184 = dma.done %s177, 256
        $region36: #{tpu_custom_call.1} parent=31 // pred_fallthru
          _
        %s185 = sand.u32 %s39, 1
        %s186 = scalar_lea.sflag [#allocation3], %s185
        %s187 = sand.u32 %s39, 1
        %s188 = smul.addr %s187, 16
        %s189 = scalar_lea.vmem [#allocation2], %s188
        %p190 = pneg %p52
        %p191 = pneg %p49
        %p192 = pneg %p73
        %p193 = pneg %p70
        %p194 = pneg %p94
        %p195 = pneg %p91
        %p196 = pneg %p122
        %p197 = pneg %p119
        %p198 = scmp.lt.s32.totalorder %s21, 1
        %s199 = scalar_select %p198, %s21, 1
        %p200 = scmp.lt.s32.totalorder %s22, 1
        %s201 = scalar_select %p200, %s22, 1
        %s202 = smul.addr %s199, 2
        %s203 = sadd.s32 %s201, %s202
        %s204 = smul.addr %s203, 4
        %s205 = scalar_lea.vmem %s3, %s204
        %p206 = scmp.lt.s32.totalorder %s21, 1
        %s207 = scalar_select %p206, %s21, 1
        %p208 = scmp.lt.s32.totalorder %s22, 1
        %s209 = scalar_select %p208, %s22, 1
        %s210 = smul.addr %s207, 2
        %s211 = sadd.s32 %s209, %s210
        %s212 = smul.addr %s211, 4
        %s213 = scalar_lea.vmem %s3, %s212
        %v215 = vld [vmem:[%s180] sm:$0xff]
        %v216 = vld [vmem:[%s180 + $0x8] sm:$0xff]
        %v217 = vpack.c.bf16 %v216, %v215
        %v218 = vld [vmem:[%s1] sm:$0x7]
        %v219 = vld [vmem:[%s2] sm:$0x3f]
        %221 = vset.pattern.permute.xlu0 0
        %222 = vperm.xlu0 %221, %v219
        %v223 = vpop.permute.xlu0 %222
        %vm225 = vcmask 130048
        %v227 = vsel %vm225, %v218, 0
        %229 = vmatprep.subr.bf16.mxu0 0
        %230 = vmatpush1.bf16.msra.mxu0 0
        %231 = vmatprep.subr.bf16.mxu0 0
        %232 = vmatpush1.bf16.msra.mxu0 0
        %233 = vmatprep.subr.bf16.mxu0 0
        %234 = vmatpush1.bf16.msra.mxu0 0
        %235 = vmatprep.subr.bf16.mxu0 0
        %236 = vmatpush1.bf16.msra.mxu0 0
        %237 = vmatprep.subr.bf16.mxu0 0
        %238 = vmatpush1.bf16.msra.mxu0 0
        %239 = vmatprep.subr.bf16.mxu0 0
        %240 = vmatpush1.bf16.msra.mxu0 0
        %241 = vmatprep.subr.bf16.mxu0 0
        %242 = vmatpush1.bf16.msra.mxu0 0
        %243 = vmatprep.subr.bf16.mxu0 0
        %244 = vmatpush1.bf16.msra.mxu0 %v217
        %245 = vmatprep.subr.bf16.mxu0 0
        %246 = vmatpush2.bf16.msra.mxu0 0
        %247 = vmatprep.subr.bf16.mxu0 0
        %248 = vmatpush2.bf16.msra.mxu0 0
        %249 = vmatprep.subr.bf16.mxu0 0
        %250 = vmatpush2.bf16.msra.mxu0 0
        %251 = vmatprep.subr.bf16.mxu0 0
        %252 = vmatpush2.bf16.msra.mxu0 0
        %253 = vmatprep.subr.bf16.mxu0 0
        %254 = vmatpush2.bf16.msra.mxu0 0
        %255 = vmatprep.subr.bf16.mxu0 0
        %256 = vmatpush2.bf16.msra.mxu0 0
        %257 = vmatprep.subr.bf16.mxu0 0
        %258 = vmatpush2.bf16.msra.mxu0 0
        %259 = vmatprep.subr.bf16.mxu0 0
        %260 = vmatpush2.bf16.msra.mxu0 0
        %261 = vmatprep.mubr.bf16.mxu0 0
        %262 = vmatmul.mubr.bf16.gmra.mxu0 %v227
        %v263 = vpop.f32.mrf.mxu0
        %v264 = vadd.f32 %v223, %v263
        %v265 = vpop.f32.mrf.mxu0
        %v266 = vpop.f32.mrf.mxu0
        %v267 = vpop.f32.mrf.mxu0
        %268 = vdwg.mxu0
        %v269 = vpack.c.bf16 %v264, %v264
        %270 = vst [vmem:[%s213] sm:$0x7] %v269
        %p271 = scmp.lt.s32.totalorder %s21, 1
        %s272 = scalar_select %p271, %s21, 1
        %p273 = scmp.lt.s32.totalorder %s22, 1
        %s274 = scalar_select %p273, %s22, 1
        %s275 = smul.addr %s272, 2
        %s276 = sadd.s32 %s274, %s275
        %s277 = smul.addr %s276, 4
        %s278 = scalar_lea.vmem %s3, %s277
        // Predicated region
        $region37: #{tpu_custom_call.1} parent=31 // pred_check
          %p279 = pneg %p119
        $region38: #{tpu_custom_call.1} parent=31 // pred_check_branch
          %281 = sbr.rel (%p279) target = $region40
        $region39: #{tpu_custom_call.1} parent=31 // pred_region
          _
        $region40: #{tpu_custom_call.1} parent=31 // pred_fallthru
          _
      $region32: #{tpu_custom_call.1} parent=5 // pred_fallthru
        _
      %p282 = scmp.le.s32.totalorder 2, %s12
      // Predicated region
      $region41: #{tpu_custom_call.1} parent=5 // pred_check
        %p283 = pneg %p282
      $region42: #{tpu_custom_call.1} parent=5 // pred_check_branch
        %285 = sbr.rel (%p283) target = $region44
      $region43: #{tpu_custom_call.1} parent=5 // pred_region
        %s286 = ssub.s32 %s12, 2
        // Predicated region
        $region45: #{tpu_custom_call.1} parent=43 // pred_check
          %p287 = pneg %p125
        $region46: #{tpu_custom_call.1} parent=43 // pred_check_branch
          %289 = sbr.rel (%p287) target = $region48
        $region47: #{tpu_custom_call.1} parent=43 // pred_region
          %p290 = scmp.lt.s32.totalorder %s23, 1
          %s291 = scalar_select %p290, %s23, 1
          %p292 = scmp.lt.s32.totalorder %s24, 1
          %s293 = scalar_select %p292, %s24, 1
          %s294 = smul.addr %s291, 2
          %s295 = sadd.s32 %s293, %s294
          %s296 = smul.addr %s295, 4
          %s297 = scalar_lea.vmem %s3, %s296
        $region48: #{tpu_custom_call.1} parent=43 // pred_fallthru
          _
      $region44: #{tpu_custom_call.1} parent=5 // pred_fallthru
        _
    $region6: #{tpu_custom_call.1} parent=1 // loop_footer
      %s16 = sadd.s32 1, %s12
    $region7: #{tpu_custom_call.1} parent=1 // loop_footer_branch
      %11 = sbr.rel target = $region3
    $region8: #{tpu_custom_call.1} parent=1 // loop_exit
      _
    %298 = vsyncpa [#allocation3], 1
    %s299 = scalar_lea.sflag [#allocation3], 1
    %300 = vsyncpa %s299, 1

</llo_original>
